<compile_context>
chip_gen: v5e
topology: v5e:2x2
jax: 0.10.0
libtpu: 0.0.40
codegen_flags: <defaults>
</compile_context>

<pallas_src>
import jax
import jax.numpy as jnp
from jax import lax
from jax.experimental import pallas as pl
from jax.experimental.pallas import tpu as pltpu

INV_SCALE_FACTOR = 2.0  # module hyperparameter
D = 8                   # feature size of the Linear(8, 8) layers


def _attn_kernel(lhs_ref, w_ref, b_ref, o_ref):
    # lhs = [x | y]            : (N, 2D)
    # w   = blockdiag(Wq, Wv)  : (2D, 2D)
    # b   = [bq | bv]          : (1, 2D)
    # Single MXU push covers both live projections:
    #   qv = [x @ Wq + bq | y @ Wv + bv]
    qv = jnp.dot(lhs_ref[...], w_ref[...],
                 preferred_element_type=jnp.float32) + b_ref[...]

    q1 = qv[:, :D]   # (N, D)  == self.query(x)
    v1 = qv[:, D:]   # (N, D)  == self.value(y)
    # (self.key(y) is dead code in the reference forward -> not computed.)

    # q2 = q1.T ; q3 = q2 / inv_scale ; q4 = softmax(q3, dim=-1)
    # Equivalent without the transpose: softmax over the N axis of q1.
    s = q1 / INV_SCALE_FACTOR
    s = s - jnp.max(s, axis=0, keepdims=True)
    e = jnp.exp(s)
    p = e * pl.reciprocal(jnp.sum(e, axis=0, keepdims=True), approx=False)

    # d1 = self.dropout(q4)
    # TODO(synk): dropout treated as identity (eval / inference mode).
    d1 = p  # (N, D), logically q4.T

    # o1 = q4 @ v1  ==  dot_general(d1, v1, contract N axis of both) -> (D, D)
    o_ref[...] = lax.dot_general(
        d1, v1,
        dimension_numbers=(((0,), (0,)), ((), ())),
        preferred_element_type=jnp.float32,
    ).astype(o_ref.dtype)


def model_forward(x, y, wq, bq, wv, bv):
    N, d = x.shape
    assert y.shape == (N, d) and d == D

    # Host-side packing: 3 input DMAs instead of 8, one fused projection matmul.
    lhs = jnp.concatenate([x, y], axis=1)                      # (N, 2D)
    w_blk = jnp.zeros((2 * D, 2 * D), jnp.float32)
    w_blk = w_blk.at[:D, :D].set(wq).at[D:, D:].set(wv)        # block-diag
    b = jnp.concatenate([bq, bv], axis=1)                      # (1, 2D)

    vmem = pl.BlockSpec(memory_space=pltpu.MemorySpace.VMEM)
    return pl.pallas_call(
        _attn_kernel,
        out_shape=jax.ShapeDtypeStruct((D, D), jnp.float32),
        in_specs=[vmem, vmem, vmem],
        out_specs=vmem,
    )(lhs, w_blk, b)


def reference_forward(x, y, wq, bq, wk, bk, wv, bv):
    # Pure-JAX reference of the PyTorch forward (dropout in eval mode).
    q1 = x @ wq + bq
    k1 = y @ wk + bk  # noqa: F841 (dead code, as in the PyTorch module)
    v1 = y @ wv + bv
    q3 = q1.T / INV_SCALE_FACTOR
    q4 = jax.nn.softmax(q3, axis=-1)
    return q4 @ v1


if __name__ == "__main__":
    key = jax.random.PRNGKey(0)
    kx, ky, k1, k2, k3, k4, k5, k6 = jax.random.split(key, 8)

    N = 2
    x = jax.random.normal(kx, (N, D), dtype=jnp.float32)
    y = jax.random.normal(ky, (N, D), dtype=jnp.float32)

    # nn.Linear(8, 8)-style parameters, stored as (in, out).
    s = 1.0 / jnp.sqrt(jnp.float32(D))
    wq = jax.random.uniform(k1, (D, D), jnp.float32, -s, s)
    bq = jax.random.uniform(k2, (1, D), jnp.float32, -s, s)
    wk = jax.random.uniform(k3, (D, D), jnp.float32, -s, s)  # module param; dead in forward
    bk = jax.random.uniform(k4, (1, D), jnp.float32, -s, s)  # module param; dead in forward
    wv = jax.random.uniform(k5, (D, D), jnp.float32, -s, s)
    bv = jax.random.uniform(k6, (1, D), jnp.float32, -s, s)

    out = model_forward(x, y, wq, bq, wv, bv)
    out = jax.block_until_ready(out)

    ref = reference_forward(x, y, wq, bq, wk, bk, wv, bv)
    assert out.shape == (D, D)
    assert jnp.allclose(out, ref, atol=1e-5, rtol=1e-5)

    print("KERNEL_OK")
</pallas_src>

<mosaic_0001>
module attributes {stable_mosaic.version = 11 : i64} {
  func.func @_attn_kernel(%arg0: memref<2x16xf32, #tpu.memory_space<vmem>>, %arg1: memref<16x16xf32, #tpu.memory_space<vmem>>, %arg2: memref<1x16xf32, #tpu.memory_space<vmem>>, %arg3: memref<8x8xf32, #tpu.memory_space<vmem>>) attributes {dimension_semantics = [], scalar_prefetch = 0 : i64, scratch_operands = 0 : i64, tpu.core_type = #tpu.core_type<tc>} {
    %c0 = arith.constant 0 : index
    %c0_0 = arith.constant 0 : index
    %0 = vector.load %arg0[%c0, %c0_0] : memref<2x16xf32, #tpu.memory_space<vmem>>, vector<2x16xf32>
    %c0_1 = arith.constant 0 : index
    %c0_2 = arith.constant 0 : index
    %1 = vector.load %arg1[%c0_1, %c0_2] : memref<16x16xf32, #tpu.memory_space<vmem>>, vector<16x16xf32>
    %cst = arith.constant dense<0.000000e+00> : vector<2x16xf32>
    %2 = tpu.matmul %0, %1, %cst {dimension_numbers = #tpu.dot_dimension_numbers<[1], [0], [0], [1], [0, 0, 1, 1], [], []>} : vector<2x16xf32>, vector<16x16xf32>, vector<2x16xf32> -> vector<2x16xf32>
    %c0_3 = arith.constant 0 : index
    %c0_4 = arith.constant 0 : index
    %3 = vector.load %arg2[%c0_3, %c0_4] : memref<1x16xf32, #tpu.memory_space<vmem>>, vector<1x16xf32>
    %4 = vector.broadcast %3 : vector<1x16xf32> to vector<2x16xf32>
    %5 = arith.addf %2, %4 : vector<2x16xf32>
    %6 = vector.extract_strided_slice %5 {offsets = [0, 0], sizes = [2, 8], strides = [1, 1]} : vector<2x16xf32> to vector<2x8xf32>
    %7 = vector.extract_strided_slice %5 {offsets = [0, 8], sizes = [2, 8], strides = [1, 1]} : vector<2x16xf32> to vector<2x8xf32>
    %cst_5 = arith.constant 2.000000e+00 : f32
    %8 = vector.broadcast %cst_5 : f32 to vector<2x8xf32>
    %9 = arith.divf %6, %8 : vector<2x8xf32>
    %cst_6 = arith.constant dense<0xFF800000> : vector<8xf32>
    %10 = vector.multi_reduction <maximumf>, %9, %cst_6 [0] : vector<2x8xf32> to vector<8xf32>
    %11 = vector.shape_cast %10 : vector<8xf32> to vector<1x8xf32>
    %12 = vector.broadcast %11 : vector<1x8xf32> to vector<2x8xf32>
    %13 = arith.subf %9, %12 : vector<2x8xf32>
    %14 = math.exp %13 : vector<2x8xf32>
    %cst_7 = arith.constant dense<0.000000e+00> : vector<8xf32>
    %15 = vector.multi_reduction <add>, %14, %cst_7 [0] : vector<2x8xf32> to vector<8xf32>
    %16 = vector.shape_cast %15 : vector<8xf32> to vector<1x8xf32>
    %17 = tpu.reciprocal %16 : vector<1x8xf32> -> vector<1x8xf32>
    %18 = vector.broadcast %17 : vector<1x8xf32> to vector<2x8xf32>
    %19 = arith.mulf %14, %18 : vector<2x8xf32>
    %cst_8 = arith.constant dense<0.000000e+00> : vector<8x8xf32>
    %20 = tpu.matmul %19, %7, %cst_8 {dimension_numbers = #tpu.dot_dimension_numbers<[0], [0], [1], [1], [0, 1, 1, 1], [], []>} : vector<2x8xf32>, vector<2x8xf32>, vector<8x8xf32> -> vector<8x8xf32>
    %c0_9 = arith.constant 0 : index
    %c0_10 = arith.constant 0 : index
    %21 = vector.load %arg3[%c0_9, %c0_10] : memref<8x8xf32, #tpu.memory_space<vmem>>, vector<8x8xf32>
    tpu.vector_store %arg3[%c0_9, %c0_10], %20 {strides = array<i32>} : memref<8x8xf32, #tpu.memory_space<vmem>>, vector<8x8xf32>,
    return
  }
}

</mosaic_0001>

<llo_original>
// kernel: tpu_custom_call.1
$region0: #{tpu_custom_call.1}
  #allocation0 [shape = 'u32[]', space=smem, size = 0x4, offset = 0x4, fixed_abs, tag = 'smem constant byte address 0x4 - core index']
  #allocation1 [shape = 'u32[72,128]{1,0:T(1,128)}', space=vmem, size = 0x9000, scoped, tag = 'internal scratch']
  %s0 = inlined_call_operand.hbm [shape: f32[2,16], index: 0, kind: input, shape index: {}]
  %s1 = inlined_call_operand.hbm [shape: f32[16,16], index: 1, kind: input, shape index: {}]
  %s2 = inlined_call_operand.vmem [shape: f32[1,16], index: 2, kind: input, shape index: {}]
  %s3 = inlined_call_operand.hbm [shape: f32[8,8], index: 3, kind: output, shape index: {}]
  %s4 = sld [smem:[#allocation0]]
  $region30: #{tpu_custom_call.1} parent=0
    _
  %s6 = ssub.s32 1, %s4
  %s7 = scalar_select 0, %s6, %s4
  $region1: #{tpu_custom_call.1} parent=0
    #allocation2 [shape = 'u8[1024]{0}', space=vmem, size = 0x400, scoped, tag = 'input window, operand 0, single buffered']
    #allocation3 [shape = 's32[1]{0}', space=sflag, size = 0x4, scoped, tag = 'scoped memory for tpu_custom_call.1']
    #allocation4 [shape = 's32[1]{0}', space=sflag, size = 0x4, scoped, tag = 'scoped memory for tpu_custom_call.1']
    #allocation5 [shape = 'u8[8192]{0}', space=vmem, size = 0x2000, scoped, tag = 'input window, operand 1, single buffered']
    #allocation6 [shape = 's32[1]{0}', space=sflag, size = 0x4, scoped, tag = 'scoped memory for tpu_custom_call.1']
    #allocation7 [shape = 'u8[4096]{0}', space=vmem, size = 0x1000, scoped, tag = 'output window, operand 0, single buffered']
    %8 = vsyncpa [#allocation3], 0
    %9 = vsyncpa [#allocation6], 0
    %10 = vsyncpa [#allocation4], 0
    // Predicated region
    $region2: #{tpu_custom_call.1} parent=1 // pred_check
      _
    $region3: #{tpu_custom_call.1} parent=1 // pred_check_branch
      %12 = sbr.rel (0) target = $region5
    $region4: #{tpu_custom_call.1} parent=1 // pred_region
      %14 = vsyncadd [#allocation3], 0
      %s16 = sshll.u32 %s0, 4
      %s17 = int_to_ptr.hbm [resolvable:$true] %s16
      %s18 = sshll.u32 [#allocation2], 4
      %s19 = int_to_ptr.vmem [resolvable:$true] %s18
      %21 = dma.hbm_to_vmem [thread:$0]  %s17, 32, %s19, [#allocation3]
    $region5: #{tpu_custom_call.1} parent=1 // pred_fallthru
      _
    // Predicated region
    $region6: #{tpu_custom_call.1} parent=1 // pred_check
      _
    $region7: #{tpu_custom_call.1} parent=1 // pred_check_branch
      %23 = sbr.rel (0) target = $region9
    $region8: #{tpu_custom_call.1} parent=1 // pred_region
      %25 = vsyncadd [#allocation6], 0
      %s26 = sshll.u32 %s1, 4
      %s27 = int_to_ptr.hbm [resolvable:$true] %s26
      %s28 = sshll.u32 [#allocation5], 4
      %s29 = int_to_ptr.vmem [resolvable:$true] %s28
      %34 = dma.hbm_to_vmem [thread:$0]  %s27, 256, %s29, [#allocation6], 128, 128, 8
    $region9: #{tpu_custom_call.1} parent=1 // pred_fallthru
      _
    // Predicated region
    $region10: #{tpu_custom_call.1} parent=1 // pred_check
      _
    $region11: #{tpu_custom_call.1} parent=1 // pred_check_branch
      %36 = sbr.rel (0) target = $region13
    $region12: #{tpu_custom_call.1} parent=1 // pred_region
      _
    $region13: #{tpu_custom_call.1} parent=1 // pred_fallthru
      _
    // Predicated region
    $region14: #{tpu_custom_call.1} parent=1 // pred_check
      _
    $region15: #{tpu_custom_call.1} parent=1 // pred_check_branch
      %38 = sbr.rel (0) target = $region17
    $region16: #{tpu_custom_call.1} parent=1 // pred_region
      %40 = dma.done [#allocation3], 32
    $region17: #{tpu_custom_call.1} parent=1 // pred_fallthru
      _
    // Predicated region
    $region18: #{tpu_custom_call.1} parent=1 // pred_check
      _
    $region19: #{tpu_custom_call.1} parent=1 // pred_check_branch
      %42 = sbr.rel (0) target = $region21
    $region20: #{tpu_custom_call.1} parent=1 // pred_region
      %44 = dma.done [#allocation6], 256
    $region21: #{tpu_custom_call.1} parent=1 // pred_fallthru
      _
    %v45 = vld [vmem:[#allocation2] sm:$0x3]
    %v46 = vld [vmem:[#allocation5] sm:$0xff]
    %v47 = vld [vmem:[#allocation5 + $0x8] sm:$0xff]
    %v48 = vld [vmem:[%s2] sm:$0x1]
    %v50 = vperm.slane %v48, 0
    %vm52 = vcmask 130048
    %v54 = vsel %vm52, %v45, 0
    %56 = vmatpush.msra.mxu0 0.0
    %57 = vmatpush.msra.mxu0 0.0
    %58 = vmatpush.msra.mxu0 0.0
    %59 = vmatpush.msra.mxu0 0.0
    %60 = vmatpush.msra.mxu0 0.0
    %61 = vmatpush.msra.mxu0 0.0
    %62 = vmatpush.msra.mxu0 0.0
    %63 = vmatpush.msra.mxu0 0.0
    %64 = vmatpush.msra.mxu0 0.0
    %65 = vmatpush.msra.mxu0 0.0
    %66 = vmatpush.msra.mxu0 0.0
    %67 = vmatpush.msra.mxu0 0.0
    %68 = vmatpush.msra.mxu0 0.0
    %69 = vmatpush.msra.mxu0 0.0
    %70 = vmatpush.msra.mxu0 %v47
    %71 = vmatpush.msra.mxu0 %v46
    %72 = vmatmul.f32.gmra.mxu0 %v54
    %v73 = vpop.f32.mrf.mxu0
    %v74 = vadd.f32 %v50, %v73
    %75 = vdwg.mxu0
    %v76 = vrcp.pop 2.0
    %v77 = vmul.f32 2.0, %v76
    %v78 = vsub.f32 1.0, %v77
    %v79 = vmul.f32 %v76, %v78
    %v80 = vadd.f32 %v76, %v79
    %vm81 = vweird.f32 %v76
    %v82 = vsel %vm81, %v76, %v80
    %v83 = vmul.f32 %v74, %v82
    %vm84 = vcmask 58368
    %v85 = vsel %vm84, %v83, -inf
    %v86 = vrot.slane %v85, 4
    %v87 = vmax.f32 %v85, %v86
    %v88 = vrot.slane %v87, 2
    %v89 = vmax.f32 %v87, %v88
    %v90 = vrot.slane %v89, 1
    %v91 = vmax.f32 %v89, %v90
    %v92 = vsub.f32 %v83, %v91
    %v93 = vmul.f32 %v92, 1.442695
    %v94 = vpow.pop %v93
    %v95 = vsel %vm84, %v94, 0.0
    %v96 = vrot.slane %v95, 4
    %v97 = vadd.f32 %v95, %v96
    %v98 = vrot.slane %v97, 2
    %v99 = vadd.f32 %v97, %v98
    %v100 = vrot.slane %v99, 1
    %v101 = vadd.f32 %v99, %v100
    %v102 = vrcp.pop %v101
    %v103 = vmul.f32 %v101, %v102
    %v104 = vsub.f32 1.0, %v103
    %v105 = vmul.f32 %v102, %v104
    %v106 = vadd.f32 %v102, %v105
    %vm107 = vweird.f32 %v101
    %vm108 = vweird.f32 %v102
    %vm109 = vmor %vm107, %vm108
    %v110 = vsel %vm109, %v102, %v106
    %v111 = vand.u32 2147483647, %v101
    %vm112 = vcmp.eq.f32.partialorder %v111, 8.507059e+37
    %v113 = vand.u32 %v101, 2147483648
    %v114 = vor.u32 1.1754944e-38, %v113
    %v115 = vsel %vm112, %v114, %v110
    %v116 = vmul.f32 %v94, %v115
    %117 = vxpose.xlu0.b32.start [1/16] %v116, 128
    %118 = vxpose.xlu0.b32.cont [2/16] 0.0, 128
    %119 = vxpose.xlu0.b32.cont [3/16] 0.0, 128
    %120 = vxpose.xlu0.b32.cont [4/16] 0.0, 128
    %121 = vxpose.xlu0.b32.cont [5/16] 0.0, 128
    %122 = vxpose.xlu0.b32.cont [6/16] 0.0, 128
    %123 = vxpose.xlu0.b32.cont [7/16] 0.0, 128
    %124 = vxpose.xlu0.b32.cont [8/16] 0.0, 128
    %125 = vxpose.xlu0.b32.cont [9/16] 0.0, 128
    %126 = vxpose.xlu0.b32.cont [10/16] 0.0, 128
    %127 = vxpose.xlu0.b32.cont [11/16] 0.0, 128
    %128 = vxpose.xlu0.b32.cont [12/16] 0.0, 128
    %129 = vxpose.xlu0.b32.cont [13/16] 0.0, 128
    %130 = vxpose.xlu0.b32.cont [14/16] 0.0, 128
    %131 = vxpose.xlu0.b32.cont [15/16] 0.0, 128
    %132 = vxpose.xlu0.b32.end [16/16] 0.0, 128
    %v133 = vpop.trf.xlu0
    %v134 = vpop.trf.xlu0
    %v135 = vpop.trf.xlu0
    %v136 = vpop.trf.xlu0
    %v137 = vpop.trf.xlu0
    %v138 = vpop.trf.xlu0
    %v139 = vpop.trf.xlu0
    %v140 = vpop.trf.xlu0
    %v141 = vpop.trf.xlu0
    %v142 = vpop.trf.xlu0
    %v143 = vpop.trf.xlu0
    %v144 = vpop.trf.xlu0
    %v145 = vpop.trf.xlu0
    %v146 = vpop.trf.xlu0
    %v147 = vpop.trf.xlu0
    %v148 = vpop.trf.xlu0
    %150 = vrot.lane.b32.xlu0 %v74, 120
    %v151 = vpop.permute.xlu0 %150
    %vm152 = vcmask 15360
    %v154 = vsel %vm152, %v133, 0
    %vm156 = vcmask 1041408
    %v157 = vsel %vm156, %v151, 0
    %159 = vmatpush.msra.mxu0 0.0
    %160 = vmatpush.msra.mxu0 0.0
    %161 = vmatpush.msra.mxu0 0.0
    %162 = vmatpush.msra.mxu0 0.0
    %163 = vmatpush.msra.mxu0 0.0
    %164 = vmatpush.msra.mxu0 0.0
    %165 = vmatpush.msra.mxu0 0.0
    %166 = vmatpush.msra.mxu0 0.0
    %167 = vmatpush.msra.mxu0 0.0
    %168 = vmatpush.msra.mxu0 0.0
    %169 = vmatpush.msra.mxu0 0.0
    %170 = vmatpush.msra.mxu0 0.0
    %171 = vmatpush.msra.mxu0 0.0
    %172 = vmatpush.msra.mxu0 0.0
    %173 = vmatpush.msra.mxu0 0.0
    %174 = vmatpush.msra.mxu0 %v157
    %175 = vmatmul.f32.gmra.mxu0 %v154
    %v176 = vpop.f32.mrf.mxu0
    %v177 = vadd.f32 0.0, %v176
    %178 = vdwg.mxu0
    %vm179 = vcmask 64512
    %180 = vst.msk [vmem:[#allocation7] sm:$0xff] %vm179, %v177
    // Predicated region
    $region22: #{tpu_custom_call.1} parent=1 // pred_check
      _
    $region23: #{tpu_custom_call.1} parent=1 // pred_check_branch
      %182 = sbr.rel (0) target = $region25
    $region24: #{tpu_custom_call.1} parent=1 // pred_region
      %184 = vsyncadd [#allocation4], 0
      %s186 = sshll.u32 [#allocation7], 4
      %s187 = int_to_ptr.vmem [resolvable:$true] %s186
      %s188 = sshll.u32 %s3, 4
      %s189 = int_to_ptr.hbm [resolvable:$true] %s188
      %191 = dma.vmem_to_hbm [thread:$0]  %s187, 128, %s189, [#allocation4]
    $region25: #{tpu_custom_call.1} parent=1 // pred_fallthru
      _
    // Predicated region
    $region26: #{tpu_custom_call.1} parent=1 // pred_check
      _
    $region27: #{tpu_custom_call.1} parent=1 // pred_check_branch
      %193 = sbr.rel (0) target = $region29
    $region28: #{tpu_custom_call.1} parent=1 // pred_region
      %195 = dma.done [#allocation4], 128
    $region29: #{tpu_custom_call.1} parent=1 // pred_fallthru
      _
    %196 = vsyncpa [#allocation3], 1
    %197 = vsyncpa [#allocation6], 1
    %198 = vsyncpa [#allocation4], 1

</llo_original>
